<compile_context>
chip_gen: v7x
topology: tpu7x:2x2x1
jax: 0.10.0
libtpu: 0.0.40
codegen_flags: <defaults>
</compile_context>

<pallas_src>
import functools

import jax
import jax.numpy as jnp
from jax.experimental import pallas as pl
from jax.experimental.pallas import tpu as pltpu
from jax.scipy.linalg import block_diag


def _critic_kernel(obs_ref, act_ref, w1o_ref, w1a_ref, w25_ref, w36_ref,
                   bias_ref, q_ref, *, hidden, q_dim):
    """Fused twin-Q forward on one batch tile: 4 matmuls + 2 ReLUs."""
    bias = bias_ref[...]                      # (3, max(hidden, q_dim)) f32
    b14 = bias[0:1, :hidden]
    b25 = bias[1:2, :hidden]
    b36 = bias[2:3, :q_dim]

    # Layer 1 split into obs / action contractions summed into one f32 acc,
    # so the wrapper never materializes sa = concat(obs, action) in HBM.
    h = jnp.dot(obs_ref[...], w1o_ref[...], preferred_element_type=jnp.float32)
    h = h + jnp.dot(act_ref[...], w1a_ref[...],
                    preferred_element_type=jnp.float32)
    h = jnp.maximum(h + b14, 0.0)

    h = h.astype(w25_ref.dtype)               # no-op in the f32 path
    h = jnp.dot(h, w25_ref[...], preferred_element_type=jnp.float32)
    h = jnp.maximum(h + b25, 0.0)

    h = h.astype(w36_ref.dtype)
    q = jnp.dot(h, w36_ref[...], preferred_element_type=jnp.float32)
    # q_dim = 1 + output_dim (< 128 lanes): trailing masked store accepted;
    # the per-tile write-back is only tb * q_dim * 4 bytes.
    q_ref[...] = q + b36


def _round_up(x, m):
    return ((x + m - 1) // m) * m


def pack_critic_params(params, obs_dim, compute_dtype=jnp.float32):
    """Fuse the 6 Linear layers into 4 wide weights + one packed bias buffer."""
    w14 = jnp.concatenate([params["w1"], params["w4"]], axis=1)
    w1o = w14[:obs_dim].astype(compute_dtype)            # (obs_dim, 128)
    w1a = w14[obs_dim:].astype(compute_dtype)            # (act_dim, 128)
    w25 = block_diag(params["w2"], params["w5"]).astype(compute_dtype)
    w36 = block_diag(params["w3"], params["w6"]).astype(compute_dtype)

    hidden = w25.shape[1]              # 128
    q_dim = w36.shape[1]               # 1 + output_dim
    width = max(hidden, q_dim)

    def _row(b):
        b = b.reshape(1, -1)
        return jnp.pad(b, ((0, 0), (0, width - b.shape[1])))

    bias = jnp.concatenate(
        [
            _row(jnp.concatenate([params["b1"], params["b4"]], axis=1)),
            _row(jnp.concatenate([params["b2"], params["b5"]], axis=1)),
            _row(jnp.concatenate([params["b3"], params["b6"]], axis=1)),
        ],
        axis=0,
    ).astype(jnp.float32)              # biases / ReLU stay f32
    return w1o, w1a, w25, w36, bias


def critic_forward(obs, action, params, *, block_b=None, use_bf16=False):
    """Pallas forward pass. Returns (q1, q2) exactly like Critic.forward."""
    obs = obs.astype(jnp.float32)
    action = action.astype(jnp.float32)
    B, obs_dim = obs.shape
    act_dim = action.shape[1]
    q1_dim = params["w3"].shape[1]
    q2_dim = params["w6"].shape[1]
    q_dim = q1_dim + q2_dim

    compute_dtype = jnp.bfloat16 if use_bf16 else jnp.float32
    w1o, w1a, w25, w36, bias = pack_critic_params(params, obs_dim, compute_dtype)
    hidden = w25.shape[0]

    obs_in = obs.astype(compute_dtype)
    act_in = action.astype(compute_dtype)

    # Batch tiling: bf16 needs 16-row sublane multiples, f32 needs 8.
    sub = 16 if use_bf16 else 8
    if block_b is not None:
        tb = max(sub, _round_up(block_b, sub))
    else:
        tb = min(1024, _round_up(B, sub))   # large tiles amortize per-step overhead
        if B >= 256:
            # Keep >= 2 grid tiles so the "parallel" axis shards over v7x's 2 TCs.
            tb = min(tb, max(128, _round_up(pl.cdiv(B, 2), 128)))
    tb = min(tb, B)                         # <= full array dim (full-dim exemption)
    n_tiles = pl.cdiv(B, tb)                # ragged last tile handled by Pallas

    flops = 2 * n_tiles * tb * (
        obs_dim * hidden + act_dim * hidden + hidden * hidden + hidden * q_dim)
    bytes_accessed = (
        obs_in.size * obs_in.dtype.itemsize
        + act_in.size * act_in.dtype.itemsize
        + w1o.size * w1o.dtype.itemsize
        + w1a.size * w1a.dtype.itemsize
        + w25.size * w25.dtype.itemsize
        + w36.size * w36.dtype.itemsize
        + bias.size * bias.dtype.itemsize
        + B * q_dim * 4)

    kernel = functools.partial(_critic_kernel, hidden=hidden, q_dim=q_dim)

    q = pl.pallas_call(
        kernel,
        out_shape=jax.ShapeDtypeStruct((B, q_dim), jnp.float32),
        grid=(n_tiles,),
        in_specs=[
            pl.BlockSpec((tb, obs_dim), lambda i: (i, 0)),        # obs tiles
            pl.BlockSpec((tb, act_dim), lambda i: (i, 0)),        # action tiles
            pl.BlockSpec((obs_dim, hidden), lambda i: (0, 0)),    # W1_obs resident
            pl.BlockSpec((act_dim, hidden), lambda i: (0, 0)),    # W1_act resident
            pl.BlockSpec((hidden, hidden), lambda i: (0, 0)),     # W25 resident
            pl.BlockSpec((hidden, q_dim), lambda i: (0, 0)),      # W36 resident
            pl.BlockSpec(bias.shape, lambda i: (0, 0)),           # packed biases
        ],
        out_specs=pl.BlockSpec((tb, q_dim), lambda i: (i, 0)),    # combined q
        compiler_params=pltpu.CompilerParams(
            dimension_semantics=("parallel",),
        ),
        cost_estimate=pl.CostEstimate(
            flops=flops, transcendentals=0, bytes_accessed=bytes_accessed),
    )(obs_in, act_in, w1o, w1a, w25, w36, bias)

    return q[:, :q1_dim], q[:, q1_dim:]


def init_params(key, input_dim, output_dim):
    """Deterministic PyTorch-style init: U(-1/sqrt(fan_in), 1/sqrt(fan_in))."""
    dims = [
        (input_dim, 64),   # l1
        (64, 64),          # l2
        (64, 1),           # l3
        (input_dim, 64),   # l4
        (64, 64),          # l5
        (64, output_dim),  # l6
    ]
    params = {}
    keys = jax.random.split(key, 2 * len(dims))
    for i, (fan_in, fan_out) in enumerate(dims):
        bound = 1.0 / jnp.sqrt(jnp.float32(fan_in))
        params[f"w{i+1}"] = jax.random.uniform(
            keys[2 * i], (fan_in, fan_out), jnp.float32, -bound, bound)
        params[f"b{i+1}"] = jax.random.uniform(
            keys[2 * i + 1], (1, fan_out), jnp.float32, -bound, bound)
    return params


def critic_forward_ref(obs, action, params):
    """Pure-JAX reference for correctness checking."""
    sa = jnp.concatenate([obs, action], axis=1)
    h1 = jnp.maximum(sa @ params["w1"] + params["b1"], 0.0)
    h1 = jnp.maximum(h1 @ params["w2"] + params["b2"], 0.0)
    q1 = h1 @ params["w3"] + params["b3"]
    h2 = jnp.maximum(sa @ params["w4"] + params["b4"], 0.0)
    h2 = jnp.maximum(h2 @ params["w5"] + params["b5"], 0.0)
    q2 = h2 @ params["w6"] + params["b6"]
    return q1, q2


if __name__ == "__main__":
    key = jax.random.PRNGKey(0)
    k_obs, k_act, k_par = jax.random.split(key, 3)

    obs_dim = 12
    act_dim = 4
    input_dim = obs_dim + act_dim   # nn.Linear(input_dim, 64)
    output_dim = 1
    params = init_params(k_par, input_dim, output_dim)

    # --- f32 path, small batch (single tile): exact match to reference ------
    batch = 8
    obs = jax.random.normal(k_obs, (batch, obs_dim), jnp.float32)
    action = jax.random.normal(k_act, (batch, act_dim), jnp.float32)
    q1_ref, q2_ref = critic_forward_ref(obs, action, params)
    q1, q2 = critic_forward(obs, action, params)
    q1 = jax.block_until_ready(q1)
    q2 = jax.block_until_ready(q2)
    assert q1.shape == (batch, 1)
    assert q2.shape == (batch, output_dim)
    assert jnp.allclose(q1, q1_ref, atol=1e-4, rtol=1e-4)
    assert jnp.allclose(q2, q2_ref, atol=1e-4, rtol=1e-4)

    # --- f32 path, larger ragged batch (2 tiles + masked trailing tile) -----
    obs2 = jax.random.normal(jax.random.PRNGKey(1), (300, obs_dim), jnp.float32)
    act2 = jax.random.normal(jax.random.PRNGKey(2), (300, act_dim), jnp.float32)
    r1, r2 = critic_forward_ref(obs2, act2, params)
    p1, p2 = critic_forward(obs2, act2, params)
    p1 = jax.block_until_ready(p1)
    p2 = jax.block_until_ready(p2)
    assert p1.shape == (300, 1) and p2.shape == (300, output_dim)
    assert jnp.allclose(p1, r1, atol=1e-4, rtol=1e-4)
    assert jnp.allclose(p2, r2, atol=1e-4, rtol=1e-4)

    # --- bf16 MXU path (v6e/v7x-friendly); loose tolerance for bf16 inputs --
    obs3 = jax.random.normal(jax.random.PRNGKey(3), (64, obs_dim), jnp.float32)
    act3 = jax.random.normal(jax.random.PRNGKey(4), (64, act_dim), jnp.float32)
    s1, s2 = critic_forward_ref(obs3, act3, params)
    b1, b2 = critic_forward(obs3, act3, params, use_bf16=True)
    b1 = jax.block_until_ready(b1)
    b2 = jax.block_until_ready(b2)
    assert jnp.all(jnp.isfinite(b1)) and jnp.all(jnp.isfinite(b2))
    assert jnp.allclose(b1, s1, atol=0.1, rtol=0.1)
    assert jnp.allclose(b2, s2, atol=0.1, rtol=0.1)

    print("KERNEL_OK")
</pallas_src>

<mosaic_0001>
module attributes {stable_mosaic.version = 11 : i64} {
  func.func @_critic_kernel(%arg0: i32, %arg1: memref<8x12xf32, #tpu.memory_space<vmem>>, %arg2: memref<8x4xf32, #tpu.memory_space<vmem>>, %arg3: memref<12x128xf32, #tpu.memory_space<vmem>>, %arg4: memref<4x128xf32, #tpu.memory_space<vmem>>, %arg5: memref<128x128xf32, #tpu.memory_space<vmem>>, %arg6: memref<128x2xf32, #tpu.memory_space<vmem>>, %arg7: memref<3x128xf32, #tpu.memory_space<vmem>>, %arg8: memref<8x2xf32, #tpu.memory_space<vmem>>) attributes {dimension_semantics = [#tpu.dimension_semantics<parallel>], iteration_bounds = array<i64: 1>, scalar_prefetch = 0 : i64, scratch_operands = 0 : i64, tpu.core_type = #tpu.core_type<tc>, window_params = [{transform_indices = @transform_0, window_bounds = array<i64: 8, 12>}, {transform_indices = @transform_1, window_bounds = array<i64: 8, 4>}, {pipeline_mode = #tpu.pipeline_mode<synchronous>, transform_indices = @transform_2, window_bounds = array<i64: 12, 128>}, {pipeline_mode = #tpu.pipeline_mode<synchronous>, transform_indices = @transform_3, window_bounds = array<i64: 4, 128>}, {pipeline_mode = #tpu.pipeline_mode<synchronous>, transform_indices = @transform_4, window_bounds = array<i64: 128, 128>}, {pipeline_mode = #tpu.pipeline_mode<synchronous>, transform_indices = @transform_5, window_bounds = array<i64: 128, 2>}, {pipeline_mode = #tpu.pipeline_mode<synchronous>, transform_indices = @transform_6, window_bounds = array<i64: 3, 128>}, {transform_indices = @transform_7, window_bounds = array<i64: 8, 2>}]} {
    %c0 = arith.constant 0 : index
    %c0_0 = arith.constant 0 : index
    %0 = vector.load %arg7[%c0, %c0_0] : memref<3x128xf32, #tpu.memory_space<vmem>>, vector<3x128xf32>
    %1 = vector.extract_strided_slice %0 {offsets = [0, 0], sizes = [1, 128], strides = [1, 1]} : vector<3x128xf32> to vector<1x128xf32>
    %2 = vector.extract_strided_slice %0 {offsets = [1, 0], sizes = [1, 128], strides = [1, 1]} : vector<3x128xf32> to vector<1x128xf32>
    %3 = vector.extract_strided_slice %0 {offsets = [2, 0], sizes = [1, 2], strides = [1, 1]} : vector<3x128xf32> to vector<1x2xf32>
    %c0_1 = arith.constant 0 : index
    %c0_2 = arith.constant 0 : index
    %4 = vector.load %arg1[%c0_1, %c0_2] : memref<8x12xf32, #tpu.memory_space<vmem>>, vector<8x12xf32>
    %c0_3 = arith.constant 0 : index
    %c0_4 = arith.constant 0 : index
    %5 = vector.load %arg3[%c0_3, %c0_4] : memref<12x128xf32, #tpu.memory_space<vmem>>, vector<12x128xf32>
    %cst = arith.constant dense<0.000000e+00> : vector<8x128xf32>
    %6 = tpu.matmul %4, %5, %cst {dimension_numbers = #tpu.dot_dimension_numbers<[1], [0], [0], [1], [0, 0, 1, 1], [], []>} : vector<8x12xf32>, vector<12x128xf32>, vector<8x128xf32> -> vector<8x128xf32>
    %c0_5 = arith.constant 0 : index
    %c0_6 = arith.constant 0 : index
    %7 = vector.load %arg2[%c0_5, %c0_6] : memref<8x4xf32, #tpu.memory_space<vmem>>, vector<8x4xf32>
    %c0_7 = arith.constant 0 : index
    %c0_8 = arith.constant 0 : index
    %8 = vector.load %arg4[%c0_7, %c0_8] : memref<4x128xf32, #tpu.memory_space<vmem>>, vector<4x128xf32>
    %cst_9 = arith.constant dense<0.000000e+00> : vector<8x128xf32>
    %9 = tpu.matmul %7, %8, %cst_9 {dimension_numbers = #tpu.dot_dimension_numbers<[1], [0], [0], [1], [0, 0, 1, 1], [], []>} : vector<8x4xf32>, vector<4x128xf32>, vector<8x128xf32> -> vector<8x128xf32>
    %10 = arith.addf %6, %9 : vector<8x128xf32>
    %11 = vector.broadcast %1 : vector<1x128xf32> to vector<8x128xf32>
    %12 = arith.addf %10, %11 : vector<8x128xf32>
    %cst_10 = arith.constant 0.000000e+00 : f32
    %13 = vector.broadcast %cst_10 : f32 to vector<8x128xf32>
    %14 = arith.maximumf %12, %13 : vector<8x128xf32>
    %c0_11 = arith.constant 0 : index
    %c0_12 = arith.constant 0 : index
    %15 = vector.load %arg5[%c0_11, %c0_12] : memref<128x128xf32, #tpu.memory_space<vmem>>, vector<128x128xf32>
    %cst_13 = arith.constant dense<0.000000e+00> : vector<8x128xf32>
    %16 = tpu.matmul %14, %15, %cst_13 {dimension_numbers = #tpu.dot_dimension_numbers<[1], [0], [0], [1], [0, 0, 1, 1], [], []>} : vector<8x128xf32>, vector<128x128xf32>, vector<8x128xf32> -> vector<8x128xf32>
    %17 = vector.broadcast %2 : vector<1x128xf32> to vector<8x128xf32>
    %18 = arith.addf %16, %17 : vector<8x128xf32>
    %cst_14 = arith.constant 0.000000e+00 : f32
    %19 = vector.broadcast %cst_14 : f32 to vector<8x128xf32>
    %20 = arith.maximumf %18, %19 : vector<8x128xf32>
    %c0_15 = arith.constant 0 : index
    %c0_16 = arith.constant 0 : index
    %21 = vector.load %arg6[%c0_15, %c0_16] : memref<128x2xf32, #tpu.memory_space<vmem>>, vector<128x2xf32>
    %cst_17 = arith.constant dense<0.000000e+00> : vector<8x2xf32>
    %22 = tpu.matmul %20, %21, %cst_17 {dimension_numbers = #tpu.dot_dimension_numbers<[1], [0], [0], [1], [0, 0, 1, 1], [], []>} : vector<8x128xf32>, vector<128x2xf32>, vector<8x2xf32> -> vector<8x2xf32>
    %23 = vector.broadcast %3 : vector<1x2xf32> to vector<8x2xf32>
    %24 = arith.addf %22, %23 : vector<8x2xf32>
    %c0_18 = arith.constant 0 : index
    %c0_19 = arith.constant 0 : index
    %25 = vector.load %arg8[%c0_18, %c0_19] : memref<8x2xf32, #tpu.memory_space<vmem>>, vector<8x2xf32>
    tpu.vector_store %arg8[%c0_18, %c0_19], %24 {strides = array<i32>} : memref<8x2xf32, #tpu.memory_space<vmem>>, vector<8x2xf32>,
    return
  }
  func.func @transform_0(%arg0: i32) -> (i32, i32) {
    %c0_i32 = arith.constant 0 : i32
    %c0_i32_0 = arith.constant 0 : i32
    return %arg0, %c0_i32 : i32, i32
  }
  func.func @transform_1(%arg0: i32) -> (i32, i32) {
    %c0_i32 = arith.constant 0 : i32
    %c0_i32_0 = arith.constant 0 : i32
    return %arg0, %c0_i32 : i32, i32
  }
  func.func @transform_2(%arg0: i32) -> (i32, i32) {
    %c0_i32 = arith.constant 0 : i32
    %c0_i32_0 = arith.constant 0 : i32
    %c0_i32_1 = arith.constant 0 : i32
    return %c0_i32, %c0_i32_0 : i32, i32
  }
  func.func @transform_3(%arg0: i32) -> (i32, i32) {
    %c0_i32 = arith.constant 0 : i32
    %c0_i32_0 = arith.constant 0 : i32
    %c0_i32_1 = arith.constant 0 : i32
    return %c0_i32, %c0_i32_0 : i32, i32
  }
  func.func @transform_4(%arg0: i32) -> (i32, i32) {
    %c0_i32 = arith.constant 0 : i32
    %c0_i32_0 = arith.constant 0 : i32
    %c0_i32_1 = arith.constant 0 : i32
    return %c0_i32, %c0_i32_0 : i32, i32
  }
  func.func @transform_5(%arg0: i32) -> (i32, i32) {
    %c0_i32 = arith.constant 0 : i32
    %c0_i32_0 = arith.constant 0 : i32
    %c0_i32_1 = arith.constant 0 : i32
    return %c0_i32, %c0_i32_0 : i32, i32
  }
  func.func @transform_6(%arg0: i32) -> (i32, i32) {
    %c0_i32 = arith.constant 0 : i32
    %c0_i32_0 = arith.constant 0 : i32
    %c0_i32_1 = arith.constant 0 : i32
    return %c0_i32, %c0_i32_0 : i32, i32
  }
  func.func @transform_7(%arg0: i32) -> (i32, i32) {
    %c0_i32 = arith.constant 0 : i32
    %c0_i32_0 = arith.constant 0 : i32
    return %arg0, %c0_i32 : i32, i32
  }
}

</mosaic_0001>

<llo_original>
// kernel: tpu_custom_call.1
$region0: #{tpu_custom_call.1}
  #allocation0 [shape = 'u32[]', space=smem, size = 0x4, offset = 0x4, fixed_abs, tag = 'smem constant byte address 0x4 - core index']
  #allocation1 [shape = 'u32[144,128]{1,0:T(1,128)}', space=vmem, size = 0x12000, scoped, tag = 'internal scratch']
  %s0 = inlined_call_operand.vmem [shape: f32[8,12], index: 0, kind: input, shape index: {}]
  %s1 = inlined_call_operand.vmem [shape: f32[8,4], index: 1, kind: input, shape index: {}]
  %s2 = inlined_call_operand.vmem [shape: f32[12,128], index: 2, kind: input, shape index: {}]
  %s3 = inlined_call_operand.vmem [shape: f32[4,128], index: 3, kind: input, shape index: {}]
  %s4 = inlined_call_operand.vmem [shape: f32[128,128], index: 4, kind: input, shape index: {}]
  %s5 = inlined_call_operand.vmem [shape: f32[128,2], index: 5, kind: input, shape index: {}]
  %s6 = inlined_call_operand.vmem [shape: f32[3,128], index: 6, kind: input, shape index: {}]
  %s7 = inlined_call_operand.vmem [shape: f32[8,2], index: 7, kind: output, shape index: {}]
  %s8 = sld [smem:[#allocation0]]
  $region38: #{tpu_custom_call.1} parent=0
    _
  %s10 = ssub.s32 1, %s8
  %s11 = scalar_select 0, %s10, %s8
  // Predicated region
  $region2: #{tpu_custom_call.1} parent=0 // pred_check
    _
  $region3: #{tpu_custom_call.1} parent=0 // pred_check_branch
    %13 = sbr.rel (0) target = $region5
  $region4: #{tpu_custom_call.1} parent=0 // pred_region
    _
  $region5: #{tpu_custom_call.1} parent=0 // pred_fallthru
    _
  // Predicated region
  $region6: #{tpu_custom_call.1} parent=0 // pred_check
    _
  $region7: #{tpu_custom_call.1} parent=0 // pred_check_branch
    %15 = sbr.rel (0) target = $region9
  $region8: #{tpu_custom_call.1} parent=0 // pred_region
    _
  $region9: #{tpu_custom_call.1} parent=0 // pred_fallthru
    _
  // Predicated region
  $region10: #{tpu_custom_call.1} parent=0 // pred_check
    _
  $region11: #{tpu_custom_call.1} parent=0 // pred_check_branch
    %17 = sbr.rel (0) target = $region13
  $region12: #{tpu_custom_call.1} parent=0 // pred_region
    _
  $region13: #{tpu_custom_call.1} parent=0 // pred_fallthru
    _
  // Predicated region
  $region14: #{tpu_custom_call.1} parent=0 // pred_check
    _
  $region15: #{tpu_custom_call.1} parent=0 // pred_check_branch
    %19 = sbr.rel (0) target = $region17
  $region16: #{tpu_custom_call.1} parent=0 // pred_region
    _
  $region17: #{tpu_custom_call.1} parent=0 // pred_fallthru
    _
  // Predicated region
  $region18: #{tpu_custom_call.1} parent=0 // pred_check
    _
  $region19: #{tpu_custom_call.1} parent=0 // pred_check_branch
    %21 = sbr.rel (0) target = $region21
  $region20: #{tpu_custom_call.1} parent=0 // pred_region
    _
  $region21: #{tpu_custom_call.1} parent=0 // pred_fallthru
    _
  // Predicated region
  $region22: #{tpu_custom_call.1} parent=0 // pred_check
    _
  $region23: #{tpu_custom_call.1} parent=0 // pred_check_branch
    %23 = sbr.rel (0) target = $region25
  $region24: #{tpu_custom_call.1} parent=0 // pred_region
    _
  $region25: #{tpu_custom_call.1} parent=0 // pred_fallthru
    _
  // Predicated region
  $region26: #{tpu_custom_call.1} parent=0 // pred_check
    _
  $region27: #{tpu_custom_call.1} parent=0 // pred_check_branch
    %25 = sbr.rel (0) target = $region29
  $region28: #{tpu_custom_call.1} parent=0 // pred_region
    _
  $region29: #{tpu_custom_call.1} parent=0 // pred_fallthru
    _
  %v26 = vld [vmem:[%s6] sm:$0x7]
  %v27 = vld [vmem:[%s0] sm:$0xff]
  %v28 = vld [vmem:[%s2] sm:$0xff]
  %v29 = vld [vmem:[%s2 + $0x8] sm:$0xf]
  %v30 = vld [vmem:[%s1] sm:$0xff]
  %v31 = vld [vmem:[%s3] sm:$0xf]
  %vm32 = vcmask 31744
  %v34 = vsel %vm32, %v30, 0
  %vm36 = vcmask 1043456
  %v38 = vsel %vm36, %v31, 0
  %40 = vmatprep.subr.mxu0 0.0
  %41 = vmatpush1.msra.mxu0 %v38
  %42 = vmatprep.subr.mxu0 0.0
  %43 = vmatpush1.msra.mxu0 0.0
  %44 = vmatprep.subr.mxu0 0.0
  %45 = vmatpush1.msra.mxu0 0.0
  %46 = vmatprep.subr.mxu0 0.0
  %47 = vmatpush1.msra.mxu0 0.0
  %48 = vmatprep.subr.mxu0 0.0
  %49 = vmatpush1.msra.mxu0 0.0
  %50 = vmatprep.subr.mxu0 0.0
  %51 = vmatpush1.msra.mxu0 0.0
  %52 = vmatprep.subr.mxu0 0.0
  %53 = vmatpush1.msra.mxu0 0.0
  %54 = vmatprep.subr.mxu0 0.0
  %55 = vmatpush1.msra.mxu0 0.0
  %56 = vmatprep.subr.mxu0 0.0
  %57 = vmatpush1.msra.mxu0 0.0
  %58 = vmatprep.subr.mxu0 0.0
  %59 = vmatpush1.msra.mxu0 0.0
  %60 = vmatprep.subr.mxu0 0.0
  %61 = vmatpush1.msra.mxu0 0.0
  %62 = vmatprep.subr.mxu0 0.0
  %63 = vmatpush1.msra.mxu0 0.0
  %64 = vmatprep.subr.mxu0 0.0
  %65 = vmatpush1.msra.mxu0 0.0
  %66 = vmatprep.subr.mxu0 0.0
  %67 = vmatpush1.msra.mxu0 0.0
  %68 = vmatprep.subr.mxu0 0.0
  %69 = vmatpush1.msra.mxu0 0.0
  %70 = vmatprep.subr.mxu0 0.0
  %71 = vmatpush1.msra.mxu0 0.0
  %72 = vmatprep.subr.mxu0 0.0
  %73 = vmatpush1.msra.mxu0 0.0
  %74 = vmatprep.subr.mxu0 0.0
  %75 = vmatpush1.msra.mxu0 0.0
  %76 = vmatprep.subr.mxu0 0.0
  %77 = vmatpush1.msra.mxu0 0.0
  %78 = vmatprep.subr.mxu0 0.0
  %79 = vmatpush1.msra.mxu0 0.0
  %80 = vmatprep.subr.mxu0 0.0
  %81 = vmatpush1.msra.mxu0 0.0
  %82 = vmatprep.subr.mxu0 0.0
  %83 = vmatpush1.msra.mxu0 0.0
  %84 = vmatprep.subr.mxu0 0.0
  %85 = vmatpush1.msra.mxu0 0.0
  %86 = vmatprep.subr.mxu0 0.0
  %87 = vmatpush1.msra.mxu0 0.0
  %88 = vmatprep.subr.mxu0 0.0
  %89 = vmatpush1.msra.mxu0 0.0
  %90 = vmatprep.subr.mxu0 0.0
  %91 = vmatpush1.msra.mxu0 0.0
  %92 = vmatprep.subr.mxu0 0.0
  %93 = vmatpush1.msra.mxu0 0.0
  %94 = vmatprep.subr.mxu0 0.0
  %95 = vmatpush1.msra.mxu0 0.0
  %96 = vmatprep.subr.mxu0 0.0
  %97 = vmatpush1.msra.mxu0 0.0
  %98 = vmatprep.subr.mxu0 0.0
  %99 = vmatpush1.msra.mxu0 0.0
  %100 = vmatprep.subr.mxu0 0.0
  %101 = vmatpush1.msra.mxu0 0.0
  %102 = vmatprep.subr.mxu0 0.0
  %103 = vmatpush1.msra.mxu0 0.0
  %104 = vmatprep.mubr.f32.mxu0 0.0
  %105 = vmatmul.mubr.f32.gmra.mrb[0].mxu0 %v34
  %v106 = vpop.f32.mrb[0].mxu0
  %v107 = vadd.f32 0.0, %v106
  %v108 = vpop.f32.mrb[0].mxu0
  %109 = vdwg.mxu0
  %vm110 = vcmask 97280
  %v112 = vsel %vm110, %v27, 0
  %v115 = vsel %vm36, %v29, 0
  %117 = vmatprep.subr.mxu0 0.0
  %118 = vmatpush1.msra.mxu0 %v28
  %119 = vmatprep.subr.mxu0 0.0
  %120 = vmatpush1.msra.mxu0 %v115
  %121 = vmatprep.subr.mxu0 0.0
  %122 = vmatpush1.msra.mxu0 0.0
  %123 = vmatprep.subr.mxu0 0.0
  %124 = vmatpush1.msra.mxu0 0.0
  %125 = vmatprep.subr.mxu0 0.0
  %126 = vmatpush1.msra.mxu0 0.0
  %127 = vmatprep.subr.mxu0 0.0
  %128 = vmatpush1.msra.mxu0 0.0
  %129 = vmatprep.subr.mxu0 0.0
  %130 = vmatpush1.msra.mxu0 0.0
  %131 = vmatprep.subr.mxu0 0.0
  %132 = vmatpush1.msra.mxu0 0.0
  %133 = vmatprep.subr.mxu0 0.0
  %134 = vmatpush1.msra.mxu0 0.0
  %135 = vmatprep.subr.mxu0 0.0
  %136 = vmatpush1.msra.mxu0 0.0
  %137 = vmatprep.subr.mxu0 0.0
  %138 = vmatpush1.msra.mxu0 0.0
  %139 = vmatprep.subr.mxu0 0.0
  %140 = vmatpush1.msra.mxu0 0.0
  %141 = vmatprep.subr.mxu0 0.0
  %142 = vmatpush1.msra.mxu0 0.0
  %143 = vmatprep.subr.mxu0 0.0
  %144 = vmatpush1.msra.mxu0 0.0
  %145 = vmatprep.subr.mxu0 0.0
  %146 = vmatpush1.msra.mxu0 0.0
  %147 = vmatprep.subr.mxu0 0.0
  %148 = vmatpush1.msra.mxu0 0.0
  %149 = vmatprep.subr.mxu0 0.0
  %150 = vmatpush1.msra.mxu0 0.0
  %151 = vmatprep.subr.mxu0 0.0
  %152 = vmatpush1.msra.mxu0 0.0
  %153 = vmatprep.subr.mxu0 0.0
  %154 = vmatpush1.msra.mxu0 0.0
  %155 = vmatprep.subr.mxu0 0.0
  %156 = vmatpush1.msra.mxu0 0.0
  %157 = vmatprep.subr.mxu0 0.0
  %158 = vmatpush1.msra.mxu0 0.0
  %159 = vmatprep.subr.mxu0 0.0
  %160 = vmatpush1.msra.mxu0 0.0
  %161 = vmatprep.subr.mxu0 0.0
  %162 = vmatpush1.msra.mxu0 0.0
  %163 = vmatprep.subr.mxu0 0.0
  %164 = vmatpush1.msra.mxu0 0.0
  %165 = vmatprep.subr.mxu0 0.0
  %166 = vmatpush1.msra.mxu0 0.0
  %167 = vmatprep.subr.mxu0 0.0
  %168 = vmatpush1.msra.mxu0 0.0
  %169 = vmatprep.subr.mxu0 0.0
  %170 = vmatpush1.msra.mxu0 0.0
  %171 = vmatprep.subr.mxu0 0.0
  %172 = vmatpush1.msra.mxu0 0.0
  %173 = vmatprep.subr.mxu0 0.0
  %174 = vmatpush1.msra.mxu0 0.0
  %175 = vmatprep.subr.mxu0 0.0
  %176 = vmatpush1.msra.mxu0 0.0
  %177 = vmatprep.subr.mxu0 0.0
  %178 = vmatpush1.msra.mxu0 0.0
  %179 = vmatprep.subr.mxu0 0.0
  %180 = vmatpush1.msra.mxu0 0.0
  %181 = vmatprep.mubr.f32.mxu0 0.0
  %182 = vmatmul.mubr.f32.gmra.mrb[0].mxu0 %v112
  %v183 = vpop.f32.mrb[0].mxu0
  %v184 = vadd.f32 %v107, %v183
  %v185 = vpop.f32.mrb[0].mxu0
  %186 = vdwg.mxu0
  %v187 = vlaneseq
  %v188 = vshrl.u32 %v187, 7
  %v189 = vsub.s32 0, %v188
  %v190 = vrot.slane %v26, %v189
  %v191 = vadd.f32 %v184, %v190
  %v192 = vmax.f32 %v191, 0.0
  %v193 = vld [vmem:[%s4] sm:$0xff]
  %v194 = vld [vmem:[%s4 + $0x8] sm:$0xff]
  %v195 = vld [vmem:[%s4 + $0x10] sm:$0xff]
  %v196 = vld [vmem:[%s4 + $0x18] sm:$0xff]
  %v197 = vld [vmem:[%s4 + $0x20] sm:$0xff]
  %v198 = vld [vmem:[%s4 + $0x28] sm:$0xff]
  %v199 = vld [vmem:[%s4 + $0x30] sm:$0xff]
  %v200 = vld [vmem:[%s4 + $0x38] sm:$0xff]
  %v201 = vld [vmem:[%s4 + $0x40] sm:$0xff]
  %v202 = vld [vmem:[%s4 + $0x48] sm:$0xff]
  %v203 = vld [vmem:[%s4 + $0x50] sm:$0xff]
  %v204 = vld [vmem:[%s4 + $0x58] sm:$0xff]
  %v205 = vld [vmem:[%s4 + $0x60] sm:$0xff]
  %v206 = vld [vmem:[%s4 + $0x68] sm:$0xff]
  %v207 = vld [vmem:[%s4 + $0x70] sm:$0xff]
  %v208 = vld [vmem:[%s4 + $0x78] sm:$0xff]
  %v209 = vlaneseq
  %v210 = vshrl.u32 %v209, 7
  %v211 = vsub.s32 1, %v210
  %v212 = vrot.slane %v26, %v211
  %213 = vmatprep.subr.mxu0 0.0
  %214 = vmatpush1.msra.mxu0 %v193
  %215 = vmatprep.subr.mxu0 0.0
  %216 = vmatpush1.msra.mxu0 %v194
  %217 = vmatprep.subr.mxu0 0.0
  %218 = vmatpush1.msra.mxu0 %v195
  %219 = vmatprep.subr.mxu0 0.0
  %220 = vmatpush1.msra.mxu0 %v196
  %221 = vmatprep.subr.mxu0 0.0
  %222 = vmatpush1.msra.mxu0 %v197
  %223 = vmatprep.subr.mxu0 0.0
  %224 = vmatpush1.msra.mxu0 %v198
  %225 = vmatprep.subr.mxu0 0.0
  %226 = vmatpush1.msra.mxu0 %v199
  %227 = vmatprep.subr.mxu0 0.0
  %228 = vmatpush1.msra.mxu0 %v200
  %229 = vmatprep.subr.mxu0 0.0
  %230 = vmatpush1.msra.mxu0 %v201
  %231 = vmatprep.subr.mxu0 0.0
  %232 = vmatpush1.msra.mxu0 %v202
  %233 = vmatprep.subr.mxu0 0.0
  %234 = vmatpush1.msra.mxu0 %v203
  %235 = vmatprep.subr.mxu0 0.0
  %236 = vmatpush1.msra.mxu0 %v204
  %237 = vmatprep.subr.mxu0 0.0
  %238 = vmatpush1.msra.mxu0 %v205
  %239 = vmatprep.subr.mxu0 0.0
  %240 = vmatpush1.msra.mxu0 %v206
  %241 = vmatprep.subr.mxu0 0.0
  %242 = vmatpush1.msra.mxu0 %v207
  %243 = vmatprep.subr.mxu0 0.0
  %244 = vmatpush1.msra.mxu0 %v208
  %245 = vmatprep.subr.mxu0 0.0
  %246 = vmatpush1.msra.mxu0 0.0
  %247 = vmatprep.subr.mxu0 0.0
  %248 = vmatpush1.msra.mxu0 0.0
  %249 = vmatprep.subr.mxu0 0.0
  %250 = vmatpush1.msra.mxu0 0.0
  %251 = vmatprep.subr.mxu0 0.0
  %252 = vmatpush1.msra.mxu0 0.0
  %253 = vmatprep.subr.mxu0 0.0
  %254 = vmatpush1.msra.mxu0 0.0
  %255 = vmatprep.subr.mxu0 0.0
  %256 = vmatpush1.msra.mxu0 0.0
  %257 = vmatprep.subr.mxu0 0.0
  %258 = vmatpush1.msra.mxu0 0.0
  %259 = vmatprep.subr.mxu0 0.0
  %260 = vmatpush1.msra.mxu0 0.0
  %261 = vmatprep.subr.mxu0 0.0
  %262 = vmatpush1.msra.mxu0 0.0
  %263 = vmatprep.subr.mxu0 0.0
  %264 = vmatpush1.msra.mxu0 0.0
  %265 = vmatprep.subr.mxu0 0.0
  %266 = vmatpush1.msra.mxu0 0.0
  %267 = vmatprep.subr.mxu0 0.0
  %268 = vmatpush1.msra.mxu0 0.0
  %269 = vmatprep.subr.mxu0 0.0
  %270 = vmatpush1.msra.mxu0 0.0
  %271 = vmatprep.subr.mxu0 0.0
  %272 = vmatpush1.msra.mxu0 0.0
  %273 = vmatprep.subr.mxu0 0.0
  %274 = vmatpush1.msra.mxu0 0.0
  %275 = vmatprep.subr.mxu0 0.0
  %276 = vmatpush1.msra.mxu0 0.0
  %277 = vmatprep.mubr.f32.mxu0 0.0
  %278 = vmatmul.mubr.f32.gmra.mrb[0].mxu0 %v192
  %v279 = vpop.f32.mrb[0].mxu0
  %v280 = vadd.f32 %v212, %v279
  %v281 = vpop.f32.mrb[0].mxu0
  %282 = vdwg.mxu0
  %v283 = vmax.f32 %v280, 0.0
  %v284 = vld [vmem:[%s5] sm:$0xff]
  %v285 = vld [vmem:[%s5 + $0x8] sm:$0xff]
  %v286 = vld [vmem:[%s5 + $0x10] sm:$0xff]
  %v287 = vld [vmem:[%s5 + $0x18] sm:$0xff]
  %v288 = vld [vmem:[%s5 + $0x20] sm:$0xff]
  %v289 = vld [vmem:[%s5 + $0x28] sm:$0xff]
  %v290 = vld [vmem:[%s5 + $0x30] sm:$0xff]
  %v291 = vld [vmem:[%s5 + $0x38] sm:$0xff]
  %v292 = vld [vmem:[%s5 + $0x40] sm:$0xff]
  %v293 = vld [vmem:[%s5 + $0x48] sm:$0xff]
  %v294 = vld [vmem:[%s5 + $0x50] sm:$0xff]
  %v295 = vld [vmem:[%s5 + $0x58] sm:$0xff]
  %v296 = vld [vmem:[%s5 + $0x60] sm:$0xff]
  %v297 = vld [vmem:[%s5 + $0x68] sm:$0xff]
  %v298 = vld [vmem:[%s5 + $0x70] sm:$0xff]
  %v299 = vld [vmem:[%s5 + $0x78] sm:$0xff]
  %v300 = vlaneseq
  %v301 = vshrl.u32 %v300, 7
  %v302 = vsub.s32 2, %v301
  %v303 = vrot.slane %v26, %v302
  %304 = vmatprep.subr.mxu0 0.0
  %305 = vmatpush1.msra.mxu0 %v284
  %306 = vmatprep.subr.mxu0 0.0
  %307 = vmatpush1.msra.mxu0 %v285
  %308 = vmatprep.subr.mxu0 0.0
  %309 = vmatpush1.msra.mxu0 %v286
  %310 = vmatprep.subr.mxu0 0.0
  %311 = vmatpush1.msra.mxu0 %v287
  %312 = vmatprep.subr.mxu0 0.0
  %313 = vmatpush1.msra.mxu0 %v288
  %314 = vmatprep.subr.mxu0 0.0
  %315 = vmatpush1.msra.mxu0 %v289
  %316 = vmatprep.subr.mxu0 0.0
  %317 = vmatpush1.msra.mxu0 %v290
  %318 = vmatprep.subr.mxu0 0.0
  %319 = vmatpush1.msra.mxu0 %v291
  %320 = vmatprep.subr.mxu0 0.0
  %321 = vmatpush1.msra.mxu0 %v292
  %322 = vmatprep.subr.mxu0 0.0
  %323 = vmatpush1.msra.mxu0 %v293
  %324 = vmatprep.subr.mxu0 0.0
  %325 = vmatpush1.msra.mxu0 %v294
  %326 = vmatprep.subr.mxu0 0.0
  %327 = vmatpush1.msra.mxu0 %v295
  %328 = vmatprep.subr.mxu0 0.0
  %329 = vmatpush1.msra.mxu0 %v296
  %330 = vmatprep.subr.mxu0 0.0
  %331 = vmatpush1.msra.mxu0 %v297
  %332 = vmatprep.subr.mxu0 0.0
  %333 = vmatpush1.msra.mxu0 %v298
  %334 = vmatprep.subr.mxu0 0.0
  %335 = vmatpush1.msra.mxu0 %v299
  %336 = vmatprep.subr.mxu0 0.0
  %337 = vmatpush1.msra.mxu0 0.0
  %338 = vmatprep.subr.mxu0 0.0
  %339 = vmatpush1.msra.mxu0 0.0
  %340 = vmatprep.subr.mxu0 0.0
  %341 = vmatpush1.msra.mxu0 0.0
  %342 = vmatprep.subr.mxu0 0.0
  %343 = vmatpush1.msra.mxu0 0.0
  %344 = vmatprep.subr.mxu0 0.0
  %345 = vmatpush1.msra.mxu0 0.0
  %346 = vmatprep.subr.mxu0 0.0
  %347 = vmatpush1.msra.mxu0 0.0
  %348 = vmatprep.subr.mxu0 0.0
  %349 = vmatpush1.msra.mxu0 0.0
  %350 = vmatprep.subr.mxu0 0.0
  %351 = vmatpush1.msra.mxu0 0.0
  %352 = vmatprep.subr.mxu0 0.0
  %353 = vmatpush1.msra.mxu0 0.0
  %354 = vmatprep.subr.mxu0 0.0
  %355 = vmatpush1.msra.mxu0 0.0
  %356 = vmatprep.subr.mxu0 0.0
  %357 = vmatpush1.msra.mxu0 0.0
  %358 = vmatprep.subr.mxu0 0.0
  %359 = vmatpush1.msra.mxu0 0.0
  %360 = vmatprep.subr.mxu0 0.0
  %361 = vmatpush1.msra.mxu0 0.0
  %362 = vmatprep.subr.mxu0 0.0
  %363 = vmatpush1.msra.mxu0 0.0
  %364 = vmatprep.subr.mxu0 0.0
  %365 = vmatpush1.msra.mxu0 0.0
  %366 = vmatprep.subr.mxu0 0.0
  %367 = vmatpush1.msra.mxu0 0.0
  %368 = vmatprep.mubr.f32.mxu0 0.0
  %369 = vmatmul.mubr.f32.gmra.mrb[0].mxu0 %v283
  %v370 = vpop.f32.mrb[0].mxu0
  %v371 = vadd.f32 %v303, %v370
  %v372 = vpop.f32.mrb[0].mxu0
  %373 = vdwg.mxu0
  %vm374 = vcmask 15360
  %375 = vst.msk [vmem:[%s7] sm:$0xff] %vm374, %v371
  // Predicated region
  $region30: #{tpu_custom_call.1} parent=0 // pred_check
    _
  $region31: #{tpu_custom_call.1} parent=0 // pred_check_branch
    %377 = sbr.rel (0) target = $region33
  $region32: #{tpu_custom_call.1} parent=0 // pred_region
    _
  $region33: #{tpu_custom_call.1} parent=0 // pred_fallthru
    _
  // Predicated region
  $region34: #{tpu_custom_call.1} parent=0 // pred_check
    _
  $region35: #{tpu_custom_call.1} parent=0 // pred_check_branch
    %379 = sbr.rel (0) target = $region37
  $region36: #{tpu_custom_call.1} parent=0 // pred_region
    _
  $region37: #{tpu_custom_call.1} parent=0 // pred_fallthru
    _

</llo_original>
